<compile_context>
chip_gen: v7x
topology: tpu7x:2x2x1
jax: 0.10.0
libtpu: 0.0.40
codegen_flags: <defaults>
</compile_context>

<pallas_src>
import math
from functools import partial

import jax
import jax.numpy as jnp
from jax.experimental import pallas as pl
from jax.experimental.pallas import tpu as pltpu

_LANE = 128
_LOG_2PI = math.log(2.0 * math.pi)


def _round_up(x, m):
    return (x + m - 1) // m * m


# --------------------------------------------------------------------------- #
# kernel
# --------------------------------------------------------------------------- #
def _ppo_kernel(obs_ref, act_ref,
                w1_ref, b1_ref, w2_ref, b2_ref,
                wh_ref, bh_ref, inv2v_ref,
                out_ref, *, action_dim, lp_const):
    """Fused PPOPolicy forward for one batch tile.

    out columns: [0:A) = policy mean, A = value, A+1 = log_prob, rest zero."""
    def mm(x, w_ref):
        w = w_ref[...]                       # resident weight, already target dtype
        return jnp.dot(x.astype(w.dtype), w, preferred_element_type=jnp.float32)

    obs = obs_ref[...]                                    # (tB, obs_dim) f32, unpadded lanes

    # feature_extractor: Linear -> ReLU -> Linear -> ReLU   (num_layers = 2)
    h = jnp.maximum(mm(obs, w1_ref) + b1_ref[...], 0.0)   # (tB, HP)
    h = jnp.maximum(mm(h, w2_ref) + b2_ref[...], 0.0)     # (tB, HP)

    # fused heads: cols [0:A) = policy_mean, col A = value_head, rest zero
    head = mm(h, wh_ref) + bh_ref[...]                     # (tB, 128) f32

    # Independent(Normal(mean, std), 1).log_prob(action)
    #   log_prob = lp_const - sum_A (a - mean)^2 / (2*var)
    act = act_ref[...]                                     # (tB, A) unpadded
    diff = act - head[:, :action_dim]
    per = (diff * diff) * inv2v_ref[...]                   # (1, A) precomputed 1/(2*var)
    log_prob = lp_const - jnp.sum(per, axis=-1, keepdims=True)   # (tB, 1)

    # narrow slab store: slot log_prob into col A+1 (head already zero there).
    out_cols = out_ref.shape[-1]
    lane = jax.lax.broadcasted_iota(jnp.int32, (head.shape[0], out_cols), 1)
    out_ref[...] = jnp.where(lane == action_dim + 1, log_prob, head[:, :out_cols])


# --------------------------------------------------------------------------- #
# parameter construction / packing
# --------------------------------------------------------------------------- #
def init_params(key, obs_dim, action_dim, hidden_dim):
    """Logical params matching PPOPolicy.__init__ (weights as (in, out))."""
    ks = jax.random.split(key, 8)

    def lin(kw, kb, fan_in, fan_out):
        bound = 1.0 / math.sqrt(fan_in)
        w = jax.random.uniform(kw, (fan_in, fan_out), jnp.float32, -bound, bound)
        b = jax.random.uniform(kb, (1, fan_out), jnp.float32, -bound, bound)
        return w, b

    w1, b1 = lin(ks[0], ks[1], obs_dim, hidden_dim)
    w2, b2 = lin(ks[2], ks[3], hidden_dim, hidden_dim)
    wm, bm = lin(ks[4], ks[5], hidden_dim, action_dim)
    wv, bv = lin(ks[6], ks[7], hidden_dim, 1)
    logstd = jnp.zeros((1, action_dim), jnp.float32)   # nn.Parameter(zeros(1, A))
    return dict(w1=w1, b1=b1, w2=w2, b2=b2, wm=wm, bm=bm, wv=wv, bv=bv,
                logstd=logstd)


def pack_params(params, *, weight_dtype=jnp.float32):
    """One-time packing: pad hidden dims to 128 lanes, fuse mean/value heads,
    hoist logstd-derived constants.  Zero padding is bit-exact.

    weight_dtype=jnp.bfloat16 pre-casts the matmul weights (biases and all
    accumulation stay f32) for full MXU rate on v6e/v7x; relax tolerances."""
    w1, b1 = params["w1"], params["b1"]     # (obs_dim, H), (1, H)
    w2, b2 = params["w2"], params["b2"]     # (H, H),       (1, H)
    wm, bm = params["wm"], params["bm"]     # (H, A),       (1, A)
    wv, bv = params["wv"], params["bv"]     # (H, 1),       (1, 1)
    logstd = params["logstd"]               # (1, A)

    obs_dim, H = w1.shape
    A = wm.shape[1]
    assert A + 2 <= _LANE, "action_dim + 2 must fit in one 128-lane head"
    HP = _round_up(H, _LANE)
    out_cols = max(8, _round_up(A + 2, 8))

    pad2 = lambda x, r, c: jnp.pad(x, ((0, r - x.shape[0]), (0, c - x.shape[1])))

    w_head = jnp.concatenate([wm, wv], axis=1)            # (H, A+1)
    b_head = jnp.concatenate([bm, bv], axis=1)            # (1, A+1)

    packed = dict(
        # NOTE: w1's K dim is kept at obs_dim (no 128-lane padding of the
        # reduction dim); obs_dim not a multiple of 8 relies on Mosaic's
        # masked sublane layouts (fine for the sizes used here).
        w1=pad2(w1, obs_dim, HP).astype(weight_dtype),
        b1=pad2(b1, 1, HP),
        w2=pad2(w2, HP, HP).astype(weight_dtype),
        b2=pad2(b2, 1, HP),
        wh=pad2(w_head, HP, _LANE).astype(weight_dtype),
        bh=pad2(b_head, 1, _LANE),
        inv2v=0.5 * jnp.exp(-2.0 * logstd),                # (1, A) = 1/(2*var)
        std=jnp.exp(logstd),                               # (1, A)
    )
    lp_const = float(jnp.sum(-logstd) - 0.5 * A * _LOG_2PI)
    meta = dict(obs_dim=obs_dim, action_dim=A, out_cols=out_cols,
                lp_const=lp_const)
    return packed, meta


# --------------------------------------------------------------------------- #
# wrapper
# --------------------------------------------------------------------------- #
def ppo_policy_forward(obs, action, packed, meta, *, block_b=2048,
                       core_parallel=False):
    """Returns (mean, std, value, log_prob) mirroring PPOPolicy.forward.

    The torch module returns a distribution object; here we return its
    parameters (mean, std broadcast per-sample) plus value and log_prob."""
    B, obs_dim = obs.shape
    assert obs_dim == meta["obs_dim"]
    A = meta["action_dim"]
    out_cols = meta["out_cols"]

    # Batch tile: large to amortize ~0.35us/grid-step overhead.  With unpadded
    # inputs the per-step VMEM footprint is tiny even at 4-8K rows, so the
    # default scoped VMEM limit is never binding (set vmem_limit_bytes only if
    # pushing much larger tiles on v7x).
    tile_b = min(block_b, _round_up(B, 8))
    grid = (pl.cdiv(B, tile_b),)       # last tile may overhang; Pallas masks it

    obs = obs.astype(jnp.float32)
    action = action.astype(jnp.float32)

    row_spec = lambda cols: pl.BlockSpec((tile_b, cols), lambda i: (i, 0))
    resident = lambda a: pl.BlockSpec(a.shape, lambda i: (0, 0))

    # TODO(synk): on v7x, verify the batch grid engages both TensorCores;
    # flip core_parallel=True (pltpu.CORE_PARALLEL) if a single TC is used.
    sem = pltpu.CORE_PARALLEL if core_parallel else pltpu.PARALLEL

    out = pl.pallas_call(
        partial(_ppo_kernel, action_dim=A, lp_const=meta["lp_const"]),
        out_shape=jax.ShapeDtypeStruct((B, out_cols), jnp.float32),
        grid=grid,
        in_specs=[
            row_spec(obs_dim),                               # obs    (tiled by i)
            row_spec(A),                                     # action (tiled by i)
            resident(packed["w1"]), resident(packed["b1"]),
            resident(packed["w2"]), resident(packed["b2"]),
            resident(packed["wh"]), resident(packed["bh"]),
            resident(packed["inv2v"]),
        ],
        out_specs=row_spec(out_cols),
        compiler_params=pltpu.CompilerParams(dimension_semantics=(sem,)),
    )(obs, action,
      packed["w1"], packed["b1"], packed["w2"], packed["b2"],
      packed["wh"], packed["bh"], packed["inv2v"])

    mean = out[:, :A]
    value = out[:, A]
    log_prob = out[:, A + 1]
    std = jnp.broadcast_to(packed["std"], (B, A))   # per-sample stddev like torch
    return mean, std, value, log_prob


# --------------------------------------------------------------------------- #
# pure-JAX reference + demo
# --------------------------------------------------------------------------- #
def _reference(obs, action, params):
    h = jnp.maximum(obs @ params["w1"] + params["b1"], 0.0)
    h = jnp.maximum(h @ params["w2"] + params["b2"], 0.0)
    mean = h @ params["wm"] + params["bm"]
    value = (h @ params["wv"] + params["bv"])[:, 0]
    std = jnp.exp(params["logstd"])
    lp = jnp.sum(-((action - mean) ** 2) / (2 * std ** 2)
                 - params["logstd"] - 0.5 * math.log(2 * math.pi), axis=-1)
    return mean, value, lp


if __name__ == "__main__":
    obs_dim, action_dim, hidden_dim = 16, 4, 32
    batch = 8

    key = jax.random.PRNGKey(0)
    kp, ko, ka = jax.random.split(key, 3)
    params = init_params(kp, obs_dim, action_dim, hidden_dim)
    packed, meta = pack_params(params)           # f32 weights: exact parity

    obs = jax.random.normal(ko, (batch, obs_dim), jnp.float32)
    action = jax.random.normal(ka, (batch, action_dim), jnp.float32)

    mean, std, value, log_prob = jax.block_until_ready(
        ppo_policy_forward(obs, action, packed, meta))

    ref_mean, ref_value, ref_lp = _reference(obs, action, params)
    assert jnp.allclose(mean, ref_mean, atol=1e-4, rtol=1e-4), "mean mismatch"
    assert jnp.allclose(value, ref_value, atol=1e-4, rtol=1e-4), "value mismatch"
    assert jnp.allclose(log_prob, ref_lp, atol=1e-4, rtol=1e-4), "log_prob mismatch"
    assert jnp.allclose(std, jnp.broadcast_to(jnp.exp(params["logstd"]),
                                              (batch, action_dim)),
                        atol=1e-6), "std mismatch"

    print("KERNEL_OK")
</pallas_src>

<mosaic_0001>
module attributes {stable_mosaic.version = 11 : i64} {
  func.func @_ppo_kernel(%arg0: i32, %arg1: memref<8x16xf32, #tpu.memory_space<vmem>>, %arg2: memref<8x4xf32, #tpu.memory_space<vmem>>, %arg3: memref<16x128xf32, #tpu.memory_space<vmem>>, %arg4: memref<1x128xf32, #tpu.memory_space<vmem>>, %arg5: memref<128x128xf32, #tpu.memory_space<vmem>>, %arg6: memref<1x128xf32, #tpu.memory_space<vmem>>, %arg7: memref<128x128xf32, #tpu.memory_space<vmem>>, %arg8: memref<1x128xf32, #tpu.memory_space<vmem>>, %arg9: memref<1x4xf32, #tpu.memory_space<vmem>>, %arg10: memref<8x8xf32, #tpu.memory_space<vmem>>) attributes {dimension_semantics = [#tpu.dimension_semantics<parallel>], iteration_bounds = array<i64: 1>, scalar_prefetch = 0 : i64, scratch_operands = 0 : i64, tpu.core_type = #tpu.core_type<tc>, window_params = [{transform_indices = @transform_0, window_bounds = array<i64: 8, 16>}, {transform_indices = @transform_1, window_bounds = array<i64: 8, 4>}, {pipeline_mode = #tpu.pipeline_mode<synchronous>, transform_indices = @transform_2, window_bounds = array<i64: 16, 128>}, {pipeline_mode = #tpu.pipeline_mode<synchronous>, transform_indices = @transform_3, window_bounds = array<i64: 1, 128>}, {pipeline_mode = #tpu.pipeline_mode<synchronous>, transform_indices = @transform_4, window_bounds = array<i64: 128, 128>}, {pipeline_mode = #tpu.pipeline_mode<synchronous>, transform_indices = @transform_5, window_bounds = array<i64: 1, 128>}, {pipeline_mode = #tpu.pipeline_mode<synchronous>, transform_indices = @transform_6, window_bounds = array<i64: 128, 128>}, {pipeline_mode = #tpu.pipeline_mode<synchronous>, transform_indices = @transform_7, window_bounds = array<i64: 1, 128>}, {pipeline_mode = #tpu.pipeline_mode<synchronous>, transform_indices = @transform_8, window_bounds = array<i64: 1, 4>}, {transform_indices = @transform_9, window_bounds = array<i64: 8, 8>}]} {
    %c0 = arith.constant 0 : index
    %c0_0 = arith.constant 0 : index
    %0 = vector.load %arg1[%c0, %c0_0] : memref<8x16xf32, #tpu.memory_space<vmem>>, vector<8x16xf32>
    %c0_1 = arith.constant 0 : index
    %c0_2 = arith.constant 0 : index
    %1 = vector.load %arg3[%c0_1, %c0_2] : memref<16x128xf32, #tpu.memory_space<vmem>>, vector<16x128xf32>
    %cst = arith.constant dense<0.000000e+00> : vector<8x128xf32>
    %2 = tpu.matmul %0, %1, %cst {dimension_numbers = #tpu.dot_dimension_numbers<[1], [0], [0], [1], [0, 0, 1, 1], [], []>} : vector<8x16xf32>, vector<16x128xf32>, vector<8x128xf32> -> vector<8x128xf32>
    %c0_3 = arith.constant 0 : index
    %c0_4 = arith.constant 0 : index
    %3 = vector.load %arg4[%c0_3, %c0_4] : memref<1x128xf32, #tpu.memory_space<vmem>>, vector<1x128xf32>
    %4 = vector.broadcast %3 : vector<1x128xf32> to vector<8x128xf32>
    %5 = arith.addf %2, %4 : vector<8x128xf32>
    %cst_5 = arith.constant 0.000000e+00 : f32
    %6 = vector.broadcast %cst_5 : f32 to vector<8x128xf32>
    %7 = arith.maximumf %5, %6 : vector<8x128xf32>
    %c0_6 = arith.constant 0 : index
    %c0_7 = arith.constant 0 : index
    %8 = vector.load %arg5[%c0_6, %c0_7] : memref<128x128xf32, #tpu.memory_space<vmem>>, vector<128x128xf32>
    %cst_8 = arith.constant dense<0.000000e+00> : vector<8x128xf32>
    %9 = tpu.matmul %7, %8, %cst_8 {dimension_numbers = #tpu.dot_dimension_numbers<[1], [0], [0], [1], [0, 0, 1, 1], [], []>} : vector<8x128xf32>, vector<128x128xf32>, vector<8x128xf32> -> vector<8x128xf32>
    %c0_9 = arith.constant 0 : index
    %c0_10 = arith.constant 0 : index
    %10 = vector.load %arg6[%c0_9, %c0_10] : memref<1x128xf32, #tpu.memory_space<vmem>>, vector<1x128xf32>
    %11 = vector.broadcast %10 : vector<1x128xf32> to vector<8x128xf32>
    %12 = arith.addf %9, %11 : vector<8x128xf32>
    %cst_11 = arith.constant 0.000000e+00 : f32
    %13 = vector.broadcast %cst_11 : f32 to vector<8x128xf32>
    %14 = arith.maximumf %12, %13 : vector<8x128xf32>
    %c0_12 = arith.constant 0 : index
    %c0_13 = arith.constant 0 : index
    %15 = vector.load %arg7[%c0_12, %c0_13] : memref<128x128xf32, #tpu.memory_space<vmem>>, vector<128x128xf32>
    %cst_14 = arith.constant dense<0.000000e+00> : vector<8x128xf32>
    %16 = tpu.matmul %14, %15, %cst_14 {dimension_numbers = #tpu.dot_dimension_numbers<[1], [0], [0], [1], [0, 0, 1, 1], [], []>} : vector<8x128xf32>, vector<128x128xf32>, vector<8x128xf32> -> vector<8x128xf32>
    %c0_15 = arith.constant 0 : index
    %c0_16 = arith.constant 0 : index
    %17 = vector.load %arg8[%c0_15, %c0_16] : memref<1x128xf32, #tpu.memory_space<vmem>>, vector<1x128xf32>
    %18 = vector.broadcast %17 : vector<1x128xf32> to vector<8x128xf32>
    %19 = arith.addf %16, %18 : vector<8x128xf32>
    %c0_17 = arith.constant 0 : index
    %c0_18 = arith.constant 0 : index
    %20 = vector.load %arg2[%c0_17, %c0_18] : memref<8x4xf32, #tpu.memory_space<vmem>>, vector<8x4xf32>
    %21 = vector.extract_strided_slice %19 {offsets = [0, 0], sizes = [8, 4], strides = [1, 1]} : vector<8x128xf32> to vector<8x4xf32>
    %22 = arith.subf %20, %21 : vector<8x4xf32>
    %23 = arith.mulf %22, %22 : vector<8x4xf32>
    %c0_19 = arith.constant 0 : index
    %c0_20 = arith.constant 0 : index
    %24 = vector.load %arg9[%c0_19, %c0_20] : memref<1x4xf32, #tpu.memory_space<vmem>>, vector<1x4xf32>
    %25 = vector.broadcast %24 : vector<1x4xf32> to vector<8x4xf32>
    %26 = arith.mulf %23, %25 : vector<8x4xf32>
    %cst_21 = arith.constant dense<0.000000e+00> : vector<8xf32>
    %27 = vector.multi_reduction <add>, %26, %cst_21 [1] : vector<8x4xf32> to vector<8xf32>
    %28 = vector.shape_cast %27 : vector<8xf32> to vector<8x1xf32>
    %cst_22 = arith.constant -3.67575407 : f32
    %29 = vector.broadcast %cst_22 : f32 to vector<8x1xf32>
    %30 = arith.subf %29, %28 : vector<8x1xf32>
    %31 = tpu.iota {dimensions = array<i32: 1>} : vector<8x8xi32>
    %c5_i32 = arith.constant 5 : i32
    %32 = vector.broadcast %c5_i32 : i32 to vector<8x8xi32>
    %33 = arith.cmpi eq, %31, %32 : vector<8x8xi32>
    %34 = vector.extract_strided_slice %19 {offsets = [0, 0], sizes = [8, 8], strides = [1, 1]} : vector<8x128xf32> to vector<8x8xf32>
    %35 = vector.shape_cast %30 : vector<8x1xf32> to vector<8x1xf32>
    %36 = vector.broadcast %35 : vector<8x1xf32> to vector<8x8xf32>
    %37 = arith.select %33, %36, %34 : vector<8x8xi1>, vector<8x8xf32>
    %c0_23 = arith.constant 0 : index
    %c0_24 = arith.constant 0 : index
    %38 = vector.load %arg10[%c0_23, %c0_24] : memref<8x8xf32, #tpu.memory_space<vmem>>, vector<8x8xf32>
    tpu.vector_store %arg10[%c0_23, %c0_24], %37 {strides = array<i32>} : memref<8x8xf32, #tpu.memory_space<vmem>>, vector<8x8xf32>,
    return
  }
  func.func @transform_0(%arg0: i32) -> (i32, i32) {
    %c0_i32 = arith.constant 0 : i32
    %c0_i32_0 = arith.constant 0 : i32
    return %arg0, %c0_i32 : i32, i32
  }
  func.func @transform_1(%arg0: i32) -> (i32, i32) {
    %c0_i32 = arith.constant 0 : i32
    %c0_i32_0 = arith.constant 0 : i32
    return %arg0, %c0_i32 : i32, i32
  }
  func.func @transform_2(%arg0: i32) -> (i32, i32) {
    %c0_i32 = arith.constant 0 : i32
    %c0_i32_0 = arith.constant 0 : i32
    %c0_i32_1 = arith.constant 0 : i32
    return %c0_i32, %c0_i32_0 : i32, i32
  }
  func.func @transform_3(%arg0: i32) -> (i32, i32) {
    %c0_i32 = arith.constant 0 : i32
    %c0_i32_0 = arith.constant 0 : i32
    %c0_i32_1 = arith.constant 0 : i32
    return %c0_i32, %c0_i32_0 : i32, i32
  }
  func.func @transform_4(%arg0: i32) -> (i32, i32) {
    %c0_i32 = arith.constant 0 : i32
    %c0_i32_0 = arith.constant 0 : i32
    %c0_i32_1 = arith.constant 0 : i32
    return %c0_i32, %c0_i32_0 : i32, i32
  }
  func.func @transform_5(%arg0: i32) -> (i32, i32) {
    %c0_i32 = arith.constant 0 : i32
    %c0_i32_0 = arith.constant 0 : i32
    %c0_i32_1 = arith.constant 0 : i32
    return %c0_i32, %c0_i32_0 : i32, i32
  }
  func.func @transform_6(%arg0: i32) -> (i32, i32) {
    %c0_i32 = arith.constant 0 : i32
    %c0_i32_0 = arith.constant 0 : i32
    %c0_i32_1 = arith.constant 0 : i32
    return %c0_i32, %c0_i32_0 : i32, i32
  }
  func.func @transform_7(%arg0: i32) -> (i32, i32) {
    %c0_i32 = arith.constant 0 : i32
    %c0_i32_0 = arith.constant 0 : i32
    %c0_i32_1 = arith.constant 0 : i32
    return %c0_i32, %c0_i32_0 : i32, i32
  }
  func.func @transform_8(%arg0: i32) -> (i32, i32) {
    %c0_i32 = arith.constant 0 : i32
    %c0_i32_0 = arith.constant 0 : i32
    %c0_i32_1 = arith.constant 0 : i32
    return %c0_i32, %c0_i32_0 : i32, i32
  }
  func.func @transform_9(%arg0: i32) -> (i32, i32) {
    %c0_i32 = arith.constant 0 : i32
    %c0_i32_0 = arith.constant 0 : i32
    return %arg0, %c0_i32 : i32, i32
  }
}

</mosaic_0001>

<llo_original>
// kernel: tpu_custom_call.1
$region0: #{tpu_custom_call.1}
  #allocation0 [shape = 'u32[]', space=smem, size = 0x4, offset = 0x4, fixed_abs, tag = 'smem constant byte address 0x4 - core index']
  #allocation1 [shape = 'u32[144,128]{1,0:T(1,128)}', space=vmem, size = 0x12000, scoped, tag = 'internal scratch']
  %s0 = inlined_call_operand.hbm [shape: f32[8,16], index: 0, kind: input, shape index: {}]
  %s1 = inlined_call_operand.vmem [shape: f32[8,4], index: 1, kind: input, shape index: {}]
  %s2 = inlined_call_operand.vmem [shape: f32[16,128], index: 2, kind: input, shape index: {}]
  %s3 = inlined_call_operand.vmem [shape: f32[1,128], index: 3, kind: input, shape index: {}]
  %s4 = inlined_call_operand.hbm [shape: f32[128,128], index: 4, kind: input, shape index: {}]
  %s5 = inlined_call_operand.vmem [shape: f32[1,128], index: 5, kind: input, shape index: {}]
  %s6 = inlined_call_operand.hbm [shape: f32[128,128], index: 6, kind: input, shape index: {}]
  %s7 = inlined_call_operand.vmem [shape: f32[1,128], index: 7, kind: input, shape index: {}]
  %s8 = inlined_call_operand.vmem [shape: f32[1,4], index: 8, kind: input, shape index: {}]
  %s9 = inlined_call_operand.hbm [shape: f32[8,8], index: 9, kind: output, shape index: {}]
  %s10 = sld [smem:[#allocation0]]
  $region58: #{tpu_custom_call.1} parent=0
    _
  %s12 = ssub.s32 1, %s10
  %s13 = scalar_select 0, %s12, %s10
  $region1: #{tpu_custom_call.1} parent=0
    #allocation2 [shape = 'u8[4096]{0}', space=vmem, size = 0x1000, scoped, tag = 'input window, operand 0, single buffered']
    #allocation3 [shape = 's32[1]{0}', space=sflag, size = 0x4, scoped, tag = 'scoped memory for tpu_custom_call.1']
    #allocation4 [shape = 's32[1]{0}', space=sflag, size = 0x4, scoped, tag = 'scoped memory for tpu_custom_call.1']
    #allocation5 [shape = 'u8[65536]{0}', space=vmem, size = 0x10000, scoped, tag = 'input window, operand 4, single buffered']
    #allocation6 [shape = 's32[1]{0}', space=sflag, size = 0x4, scoped, tag = 'scoped memory for tpu_custom_call.1']
    #allocation7 [shape = 'u8[65536]{0}', space=vmem, size = 0x10000, scoped, tag = 'input window, operand 6, single buffered']
    #allocation8 [shape = 'u8[4096]{0}', space=vmem, size = 0x1000, scoped, tag = 'output window, operand 0, single buffered']
    %14 = vsyncpa [#allocation3], 0
    %15 = vsyncpa [#allocation6], 0
    %16 = vsyncpa [#allocation4], 0
    // Predicated region
    $region2: #{tpu_custom_call.1} parent=1 // pred_check
      _
    $region3: #{tpu_custom_call.1} parent=1 // pred_check_branch
      %18 = sbr.rel (0) target = $region5
    $region4: #{tpu_custom_call.1} parent=1 // pred_region
      %s20 = ssub.s32 128, 128
      %21 = vsyncadd [#allocation3], %s20
      %s23 = sshll.u32 [#allocation2], 4
      %s24 = int_to_ptr.vmem [resolvable:$true] %s23
      %26 = dma.hbm_to_vmem [thread:$0]  %s0, 128, %s24, [#allocation3]
    $region5: #{tpu_custom_call.1} parent=1 // pred_fallthru
      _
    // Predicated region
    $region6: #{tpu_custom_call.1} parent=1 // pred_check
      _
    $region7: #{tpu_custom_call.1} parent=1 // pred_check_branch
      %28 = sbr.rel (0) target = $region9
    $region8: #{tpu_custom_call.1} parent=1 // pred_region
      _
    $region9: #{tpu_custom_call.1} parent=1 // pred_fallthru
      _
    // Predicated region
    $region10: #{tpu_custom_call.1} parent=1 // pred_check
      _
    $region11: #{tpu_custom_call.1} parent=1 // pred_check_branch
      %30 = sbr.rel (0) target = $region13
    $region12: #{tpu_custom_call.1} parent=1 // pred_region
      _
    $region13: #{tpu_custom_call.1} parent=1 // pred_fallthru
      _
    // Predicated region
    $region14: #{tpu_custom_call.1} parent=1 // pred_check
      _
    $region15: #{tpu_custom_call.1} parent=1 // pred_check_branch
      %32 = sbr.rel (0) target = $region17
    $region16: #{tpu_custom_call.1} parent=1 // pred_region
      _
    $region17: #{tpu_custom_call.1} parent=1 // pred_fallthru
      _
    // Predicated region
    $region18: #{tpu_custom_call.1} parent=1 // pred_check
      _
    $region19: #{tpu_custom_call.1} parent=1 // pred_check_branch
      %34 = sbr.rel (0) target = $region21
    $region20: #{tpu_custom_call.1} parent=1 // pred_region
      %s36 = ssub.s32 2048, 2048
      %37 = vsyncadd [#allocation6], %s36
      %s38 = sshll.u32 [#allocation5], 4
      %s39 = int_to_ptr.vmem [resolvable:$true] %s38
      %44 = dma.hbm_to_vmem [thread:$0]  %s4, 2048, %s39, [#allocation6], 128, 128, 8
    $region21: #{tpu_custom_call.1} parent=1 // pred_fallthru
      _
    // Predicated region
    $region22: #{tpu_custom_call.1} parent=1 // pred_check
      _
    $region23: #{tpu_custom_call.1} parent=1 // pred_check_branch
      %46 = sbr.rel (0) target = $region25
    $region24: #{tpu_custom_call.1} parent=1 // pred_region
      _
    $region25: #{tpu_custom_call.1} parent=1 // pred_fallthru
      _
    // Predicated region
    $region26: #{tpu_custom_call.1} parent=1 // pred_check
      _
    $region27: #{tpu_custom_call.1} parent=1 // pred_check_branch
      %48 = sbr.rel (0) target = $region29
    $region28: #{tpu_custom_call.1} parent=1 // pred_region
      %s50 = ssub.s32 2048, 2048
      %51 = vsyncadd [#allocation6], %s50
      %s52 = sshll.u32 [#allocation7], 4
      %s53 = int_to_ptr.vmem [resolvable:$true] %s52
      %58 = dma.hbm_to_vmem [thread:$0]  %s6, 2048, %s53, [#allocation6], 128, 128, 8
    $region29: #{tpu_custom_call.1} parent=1 // pred_fallthru
      _
    // Predicated region
    $region30: #{tpu_custom_call.1} parent=1 // pred_check
      _
    $region31: #{tpu_custom_call.1} parent=1 // pred_check_branch
      %60 = sbr.rel (0) target = $region33
    $region32: #{tpu_custom_call.1} parent=1 // pred_region
      _
    $region33: #{tpu_custom_call.1} parent=1 // pred_fallthru
      _
    // Predicated region
    $region34: #{tpu_custom_call.1} parent=1 // pred_check
      _
    $region35: #{tpu_custom_call.1} parent=1 // pred_check_branch
      %62 = sbr.rel (0) target = $region37
    $region36: #{tpu_custom_call.1} parent=1 // pred_region
      _
    $region37: #{tpu_custom_call.1} parent=1 // pred_fallthru
      _
    // Predicated region
    $region38: #{tpu_custom_call.1} parent=1 // pred_check
      _
    $region39: #{tpu_custom_call.1} parent=1 // pred_check_branch
      %64 = sbr.rel (0) target = $region41
    $region40: #{tpu_custom_call.1} parent=1 // pred_region
      %65 = dma.done [#allocation3], 128
    $region41: #{tpu_custom_call.1} parent=1 // pred_fallthru
      _
    // Predicated region
    $region42: #{tpu_custom_call.1} parent=1 // pred_check
      _
    $region43: #{tpu_custom_call.1} parent=1 // pred_check_branch
      %67 = sbr.rel (0) target = $region45
    $region44: #{tpu_custom_call.1} parent=1 // pred_region
      %68 = dma.done [#allocation6], 2048
    $region45: #{tpu_custom_call.1} parent=1 // pred_fallthru
      _
    // Predicated region
    $region46: #{tpu_custom_call.1} parent=1 // pred_check
      _
    $region47: #{tpu_custom_call.1} parent=1 // pred_check_branch
      %70 = sbr.rel (0) target = $region49
    $region48: #{tpu_custom_call.1} parent=1 // pred_region
      %71 = dma.done [#allocation6], 2048
    $region49: #{tpu_custom_call.1} parent=1 // pred_fallthru
      _
    %v72 = vld [vmem:[#allocation2] sm:$0xff]
    %v73 = vld [vmem:[%s2] sm:$0xff]
    %v74 = vld [vmem:[%s2 + $0x8] sm:$0xff]
    %v75 = vld [vmem:[%s3] sm:$0x1]
    %v77 = vlaneseq
    %v78 = vshrl.u32 %v77, 7
    %v79 = vsub.s32 0, %v78
    %v80 = vrot.slane %v75, %v79
    %vm82 = vcmask 130048
    %v84 = vsel %vm82, %v72, 0
    %86 = vmatprep.subr.mxu0 0.0
    %87 = vmatpush1.msra.mxu0 %v73
    %88 = vmatprep.subr.mxu0 0.0
    %89 = vmatpush1.msra.mxu0 %v74
    %90 = vmatprep.subr.mxu0 0.0
    %91 = vmatpush1.msra.mxu0 0.0
    %92 = vmatprep.subr.mxu0 0.0
    %93 = vmatpush1.msra.mxu0 0.0
    %94 = vmatprep.subr.mxu0 0.0
    %95 = vmatpush1.msra.mxu0 0.0
    %96 = vmatprep.subr.mxu0 0.0
    %97 = vmatpush1.msra.mxu0 0.0
    %98 = vmatprep.subr.mxu0 0.0
    %99 = vmatpush1.msra.mxu0 0.0
    %100 = vmatprep.subr.mxu0 0.0
    %101 = vmatpush1.msra.mxu0 0.0
    %102 = vmatprep.subr.mxu0 0.0
    %103 = vmatpush1.msra.mxu0 0.0
    %104 = vmatprep.subr.mxu0 0.0
    %105 = vmatpush1.msra.mxu0 0.0
    %106 = vmatprep.subr.mxu0 0.0
    %107 = vmatpush1.msra.mxu0 0.0
    %108 = vmatprep.subr.mxu0 0.0
    %109 = vmatpush1.msra.mxu0 0.0
    %110 = vmatprep.subr.mxu0 0.0
    %111 = vmatpush1.msra.mxu0 0.0
    %112 = vmatprep.subr.mxu0 0.0
    %113 = vmatpush1.msra.mxu0 0.0
    %114 = vmatprep.subr.mxu0 0.0
    %115 = vmatpush1.msra.mxu0 0.0
    %116 = vmatprep.subr.mxu0 0.0
    %117 = vmatpush1.msra.mxu0 0.0
    %118 = vmatprep.subr.mxu0 0.0
    %119 = vmatpush1.msra.mxu0 0.0
    %120 = vmatprep.subr.mxu0 0.0
    %121 = vmatpush1.msra.mxu0 0.0
    %122 = vmatprep.subr.mxu0 0.0
    %123 = vmatpush1.msra.mxu0 0.0
    %124 = vmatprep.subr.mxu0 0.0
    %125 = vmatpush1.msra.mxu0 0.0
    %126 = vmatprep.subr.mxu0 0.0
    %127 = vmatpush1.msra.mxu0 0.0
    %128 = vmatprep.subr.mxu0 0.0
    %129 = vmatpush1.msra.mxu0 0.0
    %130 = vmatprep.subr.mxu0 0.0
    %131 = vmatpush1.msra.mxu0 0.0
    %132 = vmatprep.subr.mxu0 0.0
    %133 = vmatpush1.msra.mxu0 0.0
    %134 = vmatprep.subr.mxu0 0.0
    %135 = vmatpush1.msra.mxu0 0.0
    %136 = vmatprep.subr.mxu0 0.0
    %137 = vmatpush1.msra.mxu0 0.0
    %138 = vmatprep.subr.mxu0 0.0
    %139 = vmatpush1.msra.mxu0 0.0
    %140 = vmatprep.subr.mxu0 0.0
    %141 = vmatpush1.msra.mxu0 0.0
    %142 = vmatprep.subr.mxu0 0.0
    %143 = vmatpush1.msra.mxu0 0.0
    %144 = vmatprep.subr.mxu0 0.0
    %145 = vmatpush1.msra.mxu0 0.0
    %146 = vmatprep.subr.mxu0 0.0
    %147 = vmatpush1.msra.mxu0 0.0
    %148 = vmatprep.subr.mxu0 0.0
    %149 = vmatpush1.msra.mxu0 0.0
    %150 = vmatprep.mubr.f32.mxu0 0.0
    %151 = vmatmul.mubr.f32.gmra.mrb[0].mxu0 %v84
    %v152 = vpop.f32.mrb[0].mxu0
    %v153 = vadd.f32 %v80, %v152
    %v154 = vpop.f32.mrb[0].mxu0
    %155 = vdwg.mxu0
    %v156 = vmax.f32 %v153, 0.0
    %v157 = vld [vmem:[#allocation5] sm:$0xff]
    %v158 = vld [vmem:[#allocation5 + $0x8] sm:$0xff]
    %v159 = vld [vmem:[#allocation5 + $0x10] sm:$0xff]
    %v160 = vld [vmem:[#allocation5 + $0x18] sm:$0xff]
    %v161 = vld [vmem:[#allocation5 + $0x20] sm:$0xff]
    %v162 = vld [vmem:[#allocation5 + $0x28] sm:$0xff]
    %v163 = vld [vmem:[#allocation5 + $0x30] sm:$0xff]
    %v164 = vld [vmem:[#allocation5 + $0x38] sm:$0xff]
    %v165 = vld [vmem:[#allocation5 + $0x40] sm:$0xff]
    %v166 = vld [vmem:[#allocation5 + $0x48] sm:$0xff]
    %v167 = vld [vmem:[#allocation5 + $0x50] sm:$0xff]
    %v168 = vld [vmem:[#allocation5 + $0x58] sm:$0xff]
    %v169 = vld [vmem:[#allocation5 + $0x60] sm:$0xff]
    %v170 = vld [vmem:[#allocation5 + $0x68] sm:$0xff]
    %v171 = vld [vmem:[#allocation5 + $0x70] sm:$0xff]
    %v172 = vld [vmem:[#allocation5 + $0x78] sm:$0xff]
    %v173 = vld [vmem:[%s5] sm:$0x1]
    %v175 = vlaneseq
    %v176 = vshrl.u32 %v175, 7
    %v177 = vsub.s32 0, %v176
    %v178 = vrot.slane %v173, %v177
    %180 = vmatprep.subr.mxu0 0.0
    %181 = vmatpush1.msra.mxu0 %v157
    %182 = vmatprep.subr.mxu0 0.0
    %183 = vmatpush1.msra.mxu0 %v158
    %184 = vmatprep.subr.mxu0 0.0
    %185 = vmatpush1.msra.mxu0 %v159
    %186 = vmatprep.subr.mxu0 0.0
    %187 = vmatpush1.msra.mxu0 %v160
    %188 = vmatprep.subr.mxu0 0.0
    %189 = vmatpush1.msra.mxu0 %v161
    %190 = vmatprep.subr.mxu0 0.0
    %191 = vmatpush1.msra.mxu0 %v162
    %192 = vmatprep.subr.mxu0 0.0
    %193 = vmatpush1.msra.mxu0 %v163
    %194 = vmatprep.subr.mxu0 0.0
    %195 = vmatpush1.msra.mxu0 %v164
    %196 = vmatprep.subr.mxu0 0.0
    %197 = vmatpush1.msra.mxu0 %v165
    %198 = vmatprep.subr.mxu0 0.0
    %199 = vmatpush1.msra.mxu0 %v166
    %200 = vmatprep.subr.mxu0 0.0
    %201 = vmatpush1.msra.mxu0 %v167
    %202 = vmatprep.subr.mxu0 0.0
    %203 = vmatpush1.msra.mxu0 %v168
    %204 = vmatprep.subr.mxu0 0.0
    %205 = vmatpush1.msra.mxu0 %v169
    %206 = vmatprep.subr.mxu0 0.0
    %207 = vmatpush1.msra.mxu0 %v170
    %208 = vmatprep.subr.mxu0 0.0
    %209 = vmatpush1.msra.mxu0 %v171
    %210 = vmatprep.subr.mxu0 0.0
    %211 = vmatpush1.msra.mxu0 %v172
    %212 = vmatprep.subr.mxu0 0.0
    %213 = vmatpush1.msra.mxu0 0.0
    %214 = vmatprep.subr.mxu0 0.0
    %215 = vmatpush1.msra.mxu0 0.0
    %216 = vmatprep.subr.mxu0 0.0
    %217 = vmatpush1.msra.mxu0 0.0
    %218 = vmatprep.subr.mxu0 0.0
    %219 = vmatpush1.msra.mxu0 0.0
    %220 = vmatprep.subr.mxu0 0.0
    %221 = vmatpush1.msra.mxu0 0.0
    %222 = vmatprep.subr.mxu0 0.0
    %223 = vmatpush1.msra.mxu0 0.0
    %224 = vmatprep.subr.mxu0 0.0
    %225 = vmatpush1.msra.mxu0 0.0
    %226 = vmatprep.subr.mxu0 0.0
    %227 = vmatpush1.msra.mxu0 0.0
    %228 = vmatprep.subr.mxu0 0.0
    %229 = vmatpush1.msra.mxu0 0.0
    %230 = vmatprep.subr.mxu0 0.0
    %231 = vmatpush1.msra.mxu0 0.0
    %232 = vmatprep.subr.mxu0 0.0
    %233 = vmatpush1.msra.mxu0 0.0
    %234 = vmatprep.subr.mxu0 0.0
    %235 = vmatpush1.msra.mxu0 0.0
    %236 = vmatprep.subr.mxu0 0.0
    %237 = vmatpush1.msra.mxu0 0.0
    %238 = vmatprep.subr.mxu0 0.0
    %239 = vmatpush1.msra.mxu0 0.0
    %240 = vmatprep.subr.mxu0 0.0
    %241 = vmatpush1.msra.mxu0 0.0
    %242 = vmatprep.subr.mxu0 0.0
    %243 = vmatpush1.msra.mxu0 0.0
    %244 = vmatprep.mubr.f32.mxu0 0.0
    %245 = vmatmul.mubr.f32.gmra.mrb[0].mxu0 %v156
    %v246 = vpop.f32.mrb[0].mxu0
    %v247 = vadd.f32 %v178, %v246
    %v248 = vpop.f32.mrb[0].mxu0
    %249 = vdwg.mxu0
    %v250 = vmax.f32 %v247, 0.0
    %v251 = vld [vmem:[#allocation7] sm:$0xff]
    %v252 = vld [vmem:[#allocation7 + $0x8] sm:$0xff]
    %v253 = vld [vmem:[#allocation7 + $0x10] sm:$0xff]
    %v254 = vld [vmem:[#allocation7 + $0x18] sm:$0xff]
    %v255 = vld [vmem:[#allocation7 + $0x20] sm:$0xff]
    %v256 = vld [vmem:[#allocation7 + $0x28] sm:$0xff]
    %v257 = vld [vmem:[#allocation7 + $0x30] sm:$0xff]
    %v258 = vld [vmem:[#allocation7 + $0x38] sm:$0xff]
    %v259 = vld [vmem:[#allocation7 + $0x40] sm:$0xff]
    %v260 = vld [vmem:[#allocation7 + $0x48] sm:$0xff]
    %v261 = vld [vmem:[#allocation7 + $0x50] sm:$0xff]
    %v262 = vld [vmem:[#allocation7 + $0x58] sm:$0xff]
    %v263 = vld [vmem:[#allocation7 + $0x60] sm:$0xff]
    %v264 = vld [vmem:[#allocation7 + $0x68] sm:$0xff]
    %v265 = vld [vmem:[#allocation7 + $0x70] sm:$0xff]
    %v266 = vld [vmem:[#allocation7 + $0x78] sm:$0xff]
    %v267 = vld [vmem:[%s7] sm:$0x1]
    %v269 = vlaneseq
    %v270 = vshrl.u32 %v269, 7
    %v271 = vsub.s32 0, %v270
    %v272 = vrot.slane %v267, %v271
    %274 = vmatprep.subr.mxu0 0.0
    %275 = vmatpush1.msra.mxu0 %v251
    %276 = vmatprep.subr.mxu0 0.0
    %277 = vmatpush1.msra.mxu0 %v252
    %278 = vmatprep.subr.mxu0 0.0
    %279 = vmatpush1.msra.mxu0 %v253
    %280 = vmatprep.subr.mxu0 0.0
    %281 = vmatpush1.msra.mxu0 %v254
    %282 = vmatprep.subr.mxu0 0.0
    %283 = vmatpush1.msra.mxu0 %v255
    %284 = vmatprep.subr.mxu0 0.0
    %285 = vmatpush1.msra.mxu0 %v256
    %286 = vmatprep.subr.mxu0 0.0
    %287 = vmatpush1.msra.mxu0 %v257
    %288 = vmatprep.subr.mxu0 0.0
    %289 = vmatpush1.msra.mxu0 %v258
    %290 = vmatprep.subr.mxu0 0.0
    %291 = vmatpush1.msra.mxu0 %v259
    %292 = vmatprep.subr.mxu0 0.0
    %293 = vmatpush1.msra.mxu0 %v260
    %294 = vmatprep.subr.mxu0 0.0
    %295 = vmatpush1.msra.mxu0 %v261
    %296 = vmatprep.subr.mxu0 0.0
    %297 = vmatpush1.msra.mxu0 %v262
    %298 = vmatprep.subr.mxu0 0.0
    %299 = vmatpush1.msra.mxu0 %v263
    %300 = vmatprep.subr.mxu0 0.0
    %301 = vmatpush1.msra.mxu0 %v264
    %302 = vmatprep.subr.mxu0 0.0
    %303 = vmatpush1.msra.mxu0 %v265
    %304 = vmatprep.subr.mxu0 0.0
    %305 = vmatpush1.msra.mxu0 %v266
    %306 = vmatprep.subr.mxu0 0.0
    %307 = vmatpush1.msra.mxu0 0.0
    %308 = vmatprep.subr.mxu0 0.0
    %309 = vmatpush1.msra.mxu0 0.0
    %310 = vmatprep.subr.mxu0 0.0
    %311 = vmatpush1.msra.mxu0 0.0
    %312 = vmatprep.subr.mxu0 0.0
    %313 = vmatpush1.msra.mxu0 0.0
    %314 = vmatprep.subr.mxu0 0.0
    %315 = vmatpush1.msra.mxu0 0.0
    %316 = vmatprep.subr.mxu0 0.0
    %317 = vmatpush1.msra.mxu0 0.0
    %318 = vmatprep.subr.mxu0 0.0
    %319 = vmatpush1.msra.mxu0 0.0
    %320 = vmatprep.subr.mxu0 0.0
    %321 = vmatpush1.msra.mxu0 0.0
    %322 = vmatprep.subr.mxu0 0.0
    %323 = vmatpush1.msra.mxu0 0.0
    %324 = vmatprep.subr.mxu0 0.0
    %325 = vmatpush1.msra.mxu0 0.0
    %326 = vmatprep.subr.mxu0 0.0
    %327 = vmatpush1.msra.mxu0 0.0
    %328 = vmatprep.subr.mxu0 0.0
    %329 = vmatpush1.msra.mxu0 0.0
    %330 = vmatprep.subr.mxu0 0.0
    %331 = vmatpush1.msra.mxu0 0.0
    %332 = vmatprep.subr.mxu0 0.0
    %333 = vmatpush1.msra.mxu0 0.0
    %334 = vmatprep.subr.mxu0 0.0
    %335 = vmatpush1.msra.mxu0 0.0
    %336 = vmatprep.subr.mxu0 0.0
    %337 = vmatpush1.msra.mxu0 0.0
    %338 = vmatprep.mubr.f32.mxu0 0.0
    %339 = vmatmul.mubr.f32.gmra.mrb[0].mxu0 %v250
    %v340 = vpop.f32.mrb[0].mxu0
    %v341 = vadd.f32 %v272, %v340
    %v342 = vpop.f32.mrb[0].mxu0
    %343 = vdwg.mxu0
    %v344 = vld [vmem:[%s1] sm:$0xff]
    %v345 = vsub.f32 %v344, %v341
    %v346 = vmul.f32 %v345, %v345
    %v347 = vld [vmem:[%s8] sm:$0x1]
    %v349 = vlaneseq
    %v350 = vshrl.u32 %v349, 7
    %v351 = vsub.s32 0, %v350
    %v352 = vrot.slane %v347, %v351
    %v354 = vmul.f32 %v346, %v352
    %vm355 = vcmask 31744
    %v356 = vsel %vm355, %v354, 0.0
    %357 = vadd.xlane.f32.xlu0 %v356
    %v358 = vpop.xlane.xlu0 %357
    %v359 = vsub.f32 -3.675754, %v358
    %v360 = vlaneseq
    %v361 = vand.u32 %v360, 127
    %vm362 = vcmp.eq.s32.totalorder %v361, 5
    %v363 = vsel %vm362, %v359, %v341
    %vm364 = vcmask 64512
    %365 = vst.msk [vmem:[#allocation8] sm:$0xff] %vm364, %v363
    // Predicated region
    $region50: #{tpu_custom_call.1} parent=1 // pred_check
      _
    $region51: #{tpu_custom_call.1} parent=1 // pred_check_branch
      %367 = sbr.rel (0) target = $region53
    $region52: #{tpu_custom_call.1} parent=1 // pred_region
      %s369 = ssub.s32 128, 128
      %370 = vsyncadd [#allocation4], %s369
      %s372 = sshll.u32 [#allocation8], 4
      %s373 = int_to_ptr.vmem [resolvable:$true] %s372
      %375 = dma.vmem_to_hbm [thread:$0]  %s373, 128, %s9, [#allocation4]
    $region53: #{tpu_custom_call.1} parent=1 // pred_fallthru
      _
    // Predicated region
    $region54: #{tpu_custom_call.1} parent=1 // pred_check
      _
    $region55: #{tpu_custom_call.1} parent=1 // pred_check_branch
      %377 = sbr.rel (0) target = $region57
    $region56: #{tpu_custom_call.1} parent=1 // pred_region
      %378 = dma.done [#allocation4], 128
    $region57: #{tpu_custom_call.1} parent=1 // pred_fallthru
      _
    %379 = vsyncpa [#allocation3], 1
    %380 = vsyncpa [#allocation6], 1
    %381 = vsyncpa [#allocation4], 1

</llo_original>
